<compile_context>
chip_gen: v5e
topology: v5e:2x2
jax: 0.10.0
libtpu: 0.0.40
codegen_flags: <defaults>
</compile_context>

<pallas_src>
import jax
import jax.numpy as jnp
from jax.experimental import pallas as pl
from jax.experimental.pallas import tpu as pltpu

TEMPERATURE = 0.1
NORM_EPS = 1e-12   # torch.nn.functional.normalize default eps (clamp_min on the norm)


def ijepa_loss_kernel(p_ref, t_ref, out_ref):
    p = p_ref[...].astype(jnp.float32)            # (B, N, D)
    t = t_ref[...].astype(jnp.float32)
    B, N, _ = p.shape

    # Cosine similarity along D: identical to dotting the two L2-normalized
    # feature vectors (F.normalize divides by clamp_min(norm, eps)).
    pt = jnp.sum(p * t, axis=-1)                                    # (B, N)
    pn = jnp.maximum(jnp.sqrt(jnp.sum(p * p, axis=-1)), NORM_EPS)   # (B, N)
    tn = jnp.maximum(jnp.sqrt(jnp.sum(t * t, axis=-1)), NORM_EPS)   # (B, N)
    sim = (pt / (pn * tn)) * (1.0 / TEMPERATURE)                    # (B, N)

    # Numerically-stable log-softmax over the N axis.
    m = jnp.max(sim, axis=-1, keepdims=True)                        # (B, 1)
    z = sim - m
    lse = jnp.log(jnp.sum(jnp.exp(z), axis=-1, keepdims=True))      # (B, 1)
    log_probs = z - lse                                             # (B, N)

    # loss = -mean(log_probs); reduce in two keepdims steps so the final
    # store is a plain dense (1, 1) write.
    row_sum = jnp.sum(log_probs, axis=-1, keepdims=True)            # (B, 1)
    total = jnp.sum(row_sum, axis=0, keepdims=True)                 # (1, 1)
    out_ref[...] = -total * (1.0 / (B * N))


def ijepa_loss(pred, tgt):
    B, N, D = pred.shape
    out = pl.pallas_call(
        ijepa_loss_kernel,
        grid=(1,),                                  # single fused invocation
        in_specs=[pl.BlockSpec((B, N, D), lambda i: (0, 0, 0)),
                  pl.BlockSpec((B, N, D), lambda i: (0, 0, 0))],
        out_specs=pl.BlockSpec((1, 1), lambda i: (0, 0)),
        out_shape=jax.ShapeDtypeStruct((1, 1), jnp.float32),
        compiler_params=pltpu.CompilerParams(
            dimension_semantics=("arbitrary",)),
    )(pred, tgt)
    return out[0, 0]


# ------------------------- pure-JAX reference -------------------------
def ref_ijepa_loss(pred, tgt):
    def norm(x):
        n = jnp.sqrt(jnp.sum(x * x, axis=-1, keepdims=True))
        return x / jnp.maximum(n, NORM_EPS)

    p = norm(pred)
    t = norm(tgt)
    sim = jnp.sum(p * t, axis=-1) / TEMPERATURE
    return -jnp.mean(jax.nn.log_softmax(sim, axis=-1))


if __name__ == "__main__":
    # (batch, num_patches, embed_dim) consistent with IJEPA predictor/target features.
    B, N, D = 2, 8, 32
    key = jax.random.PRNGKey(0)
    kp, kt = jax.random.split(key)
    pred = jax.random.normal(kp, (B, N, D), dtype=jnp.float32)
    tgt = jax.random.normal(kt, (B, N, D), dtype=jnp.float32)

    loss = jax.block_until_ready(ijepa_loss(pred, tgt))
    ref = jax.block_until_ready(ref_ijepa_loss(pred, tgt))

    assert loss.shape == ()
    assert jnp.allclose(loss, ref, atol=1e-5, rtol=1e-5), (loss, ref)
    print("KERNEL_OK")
</pallas_src>

<mosaic_0001>
module attributes {stable_mosaic.version = 11 : i64} {
  func.func @ijepa_loss_kernel(%arg0: i32, %arg1: memref<2x8x32xf32, #tpu.memory_space<vmem>>, %arg2: memref<2x8x32xf32, #tpu.memory_space<vmem>>, %arg3: memref<1x1xf32, #tpu.memory_space<vmem>>) attributes {dimension_semantics = [#tpu.dimension_semantics<arbitrary>], iteration_bounds = array<i64: 1>, scalar_prefetch = 0 : i64, scratch_operands = 0 : i64, tpu.core_type = #tpu.core_type<tc>, window_params = [{pipeline_mode = #tpu.pipeline_mode<synchronous>, transform_indices = @transform_0, window_bounds = array<i64: 2, 8, 32>}, {pipeline_mode = #tpu.pipeline_mode<synchronous>, transform_indices = @transform_1, window_bounds = array<i64: 2, 8, 32>}, {pipeline_mode = #tpu.pipeline_mode<synchronous>, transform_indices = @transform_2, window_bounds = array<i64: 1, 1>}]} {
    %c0 = arith.constant 0 : index
    %c0_0 = arith.constant 0 : index
    %c0_1 = arith.constant 0 : index
    %0 = vector.load %arg1[%c0, %c0_0, %c0_1] : memref<2x8x32xf32, #tpu.memory_space<vmem>>, vector<2x8x32xf32>
    %c0_2 = arith.constant 0 : index
    %c0_3 = arith.constant 0 : index
    %c0_4 = arith.constant 0 : index
    %1 = vector.load %arg2[%c0_2, %c0_3, %c0_4] : memref<2x8x32xf32, #tpu.memory_space<vmem>>, vector<2x8x32xf32>
    %2 = arith.mulf %0, %1 : vector<2x8x32xf32>
    %cst = arith.constant dense<0.000000e+00> : vector<2x8xf32>
    %3 = vector.multi_reduction <add>, %2, %cst [2] : vector<2x8x32xf32> to vector<2x8xf32>
    %4 = arith.mulf %0, %0 : vector<2x8x32xf32>
    %cst_5 = arith.constant dense<0.000000e+00> : vector<2x8xf32>
    %5 = vector.multi_reduction <add>, %4, %cst_5 [2] : vector<2x8x32xf32> to vector<2x8xf32>
    %6 = math.sqrt %5 : vector<2x8xf32>
    %cst_6 = arith.constant 9.99999996E-13 : f32
    %7 = vector.broadcast %cst_6 : f32 to vector<2x8xf32>
    %8 = arith.maximumf %6, %7 : vector<2x8xf32>
    %9 = arith.mulf %1, %1 : vector<2x8x32xf32>
    %cst_7 = arith.constant dense<0.000000e+00> : vector<2x8xf32>
    %10 = vector.multi_reduction <add>, %9, %cst_7 [2] : vector<2x8x32xf32> to vector<2x8xf32>
    %11 = math.sqrt %10 : vector<2x8xf32>
    %cst_8 = arith.constant 9.99999996E-13 : f32
    %12 = vector.broadcast %cst_8 : f32 to vector<2x8xf32>
    %13 = arith.maximumf %11, %12 : vector<2x8xf32>
    %14 = arith.mulf %8, %13 : vector<2x8xf32>
    %15 = arith.divf %3, %14 : vector<2x8xf32>
    %cst_9 = arith.constant 1.000000e+01 : f32
    %16 = vector.broadcast %cst_9 : f32 to vector<2x8xf32>
    %17 = arith.mulf %15, %16 : vector<2x8xf32>
    %cst_10 = arith.constant dense<0xFF800000> : vector<2xf32>
    %18 = vector.multi_reduction <maximumf>, %17, %cst_10 [1] : vector<2x8xf32> to vector<2xf32>
    %19 = vector.shape_cast %18 : vector<2xf32> to vector<2x1xf32>
    %20 = vector.broadcast %19 : vector<2x1xf32> to vector<2x8xf32>
    %21 = arith.subf %17, %20 : vector<2x8xf32>
    %22 = math.exp %21 : vector<2x8xf32>
    %cst_11 = arith.constant dense<0.000000e+00> : vector<2xf32>
    %23 = vector.multi_reduction <add>, %22, %cst_11 [1] : vector<2x8xf32> to vector<2xf32>
    %24 = vector.shape_cast %23 : vector<2xf32> to vector<2x1xf32>
    %25 = math.log %24 : vector<2x1xf32>
    %26 = vector.broadcast %25 : vector<2x1xf32> to vector<2x8xf32>
    %27 = arith.subf %21, %26 : vector<2x8xf32>
    %cst_12 = arith.constant dense<0.000000e+00> : vector<2xf32>
    %28 = vector.multi_reduction <add>, %27, %cst_12 [1] : vector<2x8xf32> to vector<2xf32>
    %29 = vector.shape_cast %28 : vector<2xf32> to vector<2x1xf32>
    %cst_13 = arith.constant dense<0.000000e+00> : vector<1xf32>
    %30 = vector.multi_reduction <add>, %29, %cst_13 [0] : vector<2x1xf32> to vector<1xf32>
    %31 = vector.shape_cast %30 : vector<1xf32> to vector<1x1xf32>
    %cst_14 = arith.constant 0.000000e+00 : f32
    %32 = vector.broadcast %cst_14 : f32 to vector<1x1xf32>
    %33 = arith.subf %32, %31 : vector<1x1xf32>
    %cst_15 = arith.constant 6.250000e-02 : f32
    %34 = vector.broadcast %cst_15 : f32 to vector<1x1xf32>
    %35 = arith.mulf %33, %34 : vector<1x1xf32>
    %c0_16 = arith.constant 0 : index
    %c0_17 = arith.constant 0 : index
    %36 = vector.load %arg3[%c0_16, %c0_17] : memref<1x1xf32, #tpu.memory_space<vmem>>, vector<1x1xf32>
    tpu.vector_store %arg3[%c0_16, %c0_17], %35 {strides = array<i32>} : memref<1x1xf32, #tpu.memory_space<vmem>>, vector<1x1xf32>,
    return
  }
  func.func @transform_0(%arg0: i32) -> (i32, i32, i32) {
    %c0_i32 = arith.constant 0 : i32
    %c0_i32_0 = arith.constant 0 : i32
    %c0_i32_1 = arith.constant 0 : i32
    %c0_i32_2 = arith.constant 0 : i32
    return %c0_i32, %c0_i32_0, %c0_i32_1 : i32, i32, i32
  }
  func.func @transform_1(%arg0: i32) -> (i32, i32, i32) {
    %c0_i32 = arith.constant 0 : i32
    %c0_i32_0 = arith.constant 0 : i32
    %c0_i32_1 = arith.constant 0 : i32
    %c0_i32_2 = arith.constant 0 : i32
    return %c0_i32, %c0_i32_0, %c0_i32_1 : i32, i32, i32
  }
  func.func @transform_2(%arg0: i32) -> (i32, i32) {
    %c0_i32 = arith.constant 0 : i32
    %c0_i32_0 = arith.constant 0 : i32
    %c0_i32_1 = arith.constant 0 : i32
    return %c0_i32, %c0_i32_0 : i32, i32
  }
}

</mosaic_0001>

<llo_original>
// kernel: tpu_custom_call.1
$region0: #{tpu_custom_call.1}
  #allocation0 [shape = 'u32[]', space=smem, size = 0x4, offset = 0x4, fixed_abs, tag = 'smem constant byte address 0x4 - core index']
  #allocation1 [shape = 'u32[72,128]{1,0:T(1,128)}', space=vmem, size = 0x9000, scoped, tag = 'internal scratch']
  %s0 = inlined_call_operand.hbm [shape: f32[2,8,32], index: 0, kind: input, shape index: {}]
  %s1 = inlined_call_operand.hbm [shape: f32[2,8,32], index: 1, kind: input, shape index: {}]
  %s2 = inlined_call_operand.hbm [shape: f32[1,1], index: 2, kind: output, shape index: {}]
  %s3 = sld [smem:[#allocation0]]
  $region26: #{tpu_custom_call.1} parent=0
    _
  %s5 = ssub.s32 1, %s3
  %s6 = scalar_select 0, %s5, %s3
  $region1: #{tpu_custom_call.1} parent=0
    #allocation2 [shape = 'u8[8192]{0}', space=vmem, size = 0x2000, scoped, tag = 'input window, operand 0, single buffered']
    #allocation3 [shape = 's32[1]{0}', space=sflag, size = 0x4, scoped, tag = 'scoped memory for tpu_custom_call.1']
    #allocation4 [shape = 's32[1]{0}', space=sflag, size = 0x4, scoped, tag = 'scoped memory for tpu_custom_call.1']
    #allocation5 [shape = 'u8[8192]{0}', space=vmem, size = 0x2000, scoped, tag = 'input window, operand 1, single buffered']
    #allocation6 [shape = 's32[1]{0}', space=sflag, size = 0x4, scoped, tag = 'scoped memory for tpu_custom_call.1']
    #allocation7 [shape = 'u8[512]{0}', space=vmem, size = 0x400, scoped, tag = 'output window, operand 0, single buffered']
    %7 = vsyncpa [#allocation3], 0
    %8 = vsyncpa [#allocation6], 0
    %9 = vsyncpa [#allocation4], 0
    // Predicated region
    $region2: #{tpu_custom_call.1} parent=1 // pred_check
      _
    $region3: #{tpu_custom_call.1} parent=1 // pred_check_branch
      %11 = sbr.rel (0) target = $region5
    $region4: #{tpu_custom_call.1} parent=1 // pred_region
      %13 = vsyncadd [#allocation3], 0
      %s14 = sshll.u32 %s0, 4
      %s15 = int_to_ptr.hbm [resolvable:$true] %s14
      %s16 = sshll.u32 [#allocation2], 4
      %s17 = int_to_ptr.vmem [resolvable:$true] %s16
      %22 = dma.hbm_to_vmem [thread:$0]  %s15, 256, %s17, [#allocation3], 128, 128, 8
    $region5: #{tpu_custom_call.1} parent=1 // pred_fallthru
      _
    // Predicated region
    $region6: #{tpu_custom_call.1} parent=1 // pred_check
      _
    $region7: #{tpu_custom_call.1} parent=1 // pred_check_branch
      %24 = sbr.rel (0) target = $region9
    $region8: #{tpu_custom_call.1} parent=1 // pred_region
      %26 = vsyncadd [#allocation6], 0
      %s27 = sshll.u32 %s1, 4
      %s28 = int_to_ptr.hbm [resolvable:$true] %s27
      %s29 = sshll.u32 [#allocation5], 4
      %s30 = int_to_ptr.vmem [resolvable:$true] %s29
      %35 = dma.hbm_to_vmem [thread:$0]  %s28, 256, %s30, [#allocation6], 128, 128, 8
    $region9: #{tpu_custom_call.1} parent=1 // pred_fallthru
      _
    // Predicated region
    $region10: #{tpu_custom_call.1} parent=1 // pred_check
      _
    $region11: #{tpu_custom_call.1} parent=1 // pred_check_branch
      %37 = sbr.rel (0) target = $region13
    $region12: #{tpu_custom_call.1} parent=1 // pred_region
      %39 = dma.done [#allocation3], 256
    $region13: #{tpu_custom_call.1} parent=1 // pred_fallthru
      _
    // Predicated region
    $region14: #{tpu_custom_call.1} parent=1 // pred_check
      _
    $region15: #{tpu_custom_call.1} parent=1 // pred_check_branch
      %41 = sbr.rel (0) target = $region17
    $region16: #{tpu_custom_call.1} parent=1 // pred_region
      %43 = dma.done [#allocation6], 256
    $region17: #{tpu_custom_call.1} parent=1 // pred_fallthru
      _
    %v44 = vld [vmem:[#allocation2] sm:$0xff]
    %v45 = vld [vmem:[#allocation2 + $0x8] sm:$0xff]
    %v46 = vld [vmem:[#allocation5] sm:$0xff]
    %v47 = vld [vmem:[#allocation5 + $0x8] sm:$0xff]
    %v48 = vmul.f32 %v44, %v46
    %v49 = vmul.f32 %v45, %v47
    %vm50 = vcmask 261120
    %v51 = vsel %vm50, %v48, 0.0
    %52 = vadd.xlane.f32.xlu0 %v51
    %v53 = vpop.xlane.xlu0 %52
    %v54 = vsel %vm50, %v49, 0.0
    %55 = vadd.xlane.f32.xlu0 %v54
    %v56 = vpop.xlane.xlu0 %55
    %v57 = vmul.f32 %v44, %v44
    %v58 = vmul.f32 %v45, %v45
    %v59 = vsel %vm50, %v57, 0.0
    %60 = vadd.xlane.f32.xlu0 %v59
    %v61 = vpop.xlane.xlu0 %60
    %v62 = vsel %vm50, %v58, 0.0
    %63 = vadd.xlane.f32.xlu0 %v62
    %v64 = vpop.xlane.xlu0 %63
    %v65 = vrsqrt.pop %v61
    %v66 = vmul.f32 %v65, %v61
    %v67 = vmul.f32 %v66, %v65
    %v68 = vmul.f32 0.5, %v67
    %v69 = vsub.f32 1.5, %v68
    %v70 = vmul.f32 %v65, %v69
    %v71 = vmul.f32 %v61, %v70
    %vm72 = vcmp.eq.f32.partialorder %v61, inf
    %v73 = vsel %vm72, %v61, %v71
    %vm74 = vcmp.eq.f32.partialorder %v61, 0.0
    %v75 = vand.u32 %v61, 2147483648
    %v76 = vsel %vm74, %v75, %v73
    %v77 = vrsqrt.pop %v64
    %v78 = vmul.f32 %v77, %v64
    %v79 = vmul.f32 %v78, %v77
    %v80 = vmul.f32 0.5, %v79
    %v81 = vsub.f32 1.5, %v80
    %v82 = vmul.f32 %v77, %v81
    %v83 = vmul.f32 %v64, %v82
    %vm84 = vcmp.eq.f32.partialorder %v64, inf
    %v85 = vsel %vm84, %v64, %v83
    %vm86 = vcmp.eq.f32.partialorder %v64, 0.0
    %v87 = vand.u32 %v64, 2147483648
    %v88 = vsel %vm86, %v87, %v85
    %v89 = vmax.f32 %v76, 1e-12
    %v90 = vmax.f32 %v88, 1e-12
    %v91 = vmul.f32 %v46, %v46
    %v92 = vmul.f32 %v47, %v47
    %v93 = vsel %vm50, %v91, 0.0
    %94 = vadd.xlane.f32.xlu0 %v93
    %v95 = vpop.xlane.xlu0 %94
    %v96 = vsel %vm50, %v92, 0.0
    %97 = vadd.xlane.f32.xlu0 %v96
    %v98 = vpop.xlane.xlu0 %97
    %v99 = vrsqrt.pop %v95
    %v100 = vmul.f32 %v99, %v95
    %v101 = vmul.f32 %v100, %v99
    %v102 = vmul.f32 0.5, %v101
    %v103 = vsub.f32 1.5, %v102
    %v104 = vmul.f32 %v99, %v103
    %v105 = vmul.f32 %v95, %v104
    %vm106 = vcmp.eq.f32.partialorder %v95, inf
    %v107 = vsel %vm106, %v95, %v105
    %vm108 = vcmp.eq.f32.partialorder %v95, 0.0
    %v109 = vand.u32 %v95, 2147483648
    %v110 = vsel %vm108, %v109, %v107
    %v111 = vrsqrt.pop %v98
    %v112 = vmul.f32 %v111, %v98
    %v113 = vmul.f32 %v112, %v111
    %v114 = vmul.f32 0.5, %v113
    %v115 = vsub.f32 1.5, %v114
    %v116 = vmul.f32 %v111, %v115
    %v117 = vmul.f32 %v98, %v116
    %vm118 = vcmp.eq.f32.partialorder %v98, inf
    %v119 = vsel %vm118, %v98, %v117
    %vm120 = vcmp.eq.f32.partialorder %v98, 0.0
    %v121 = vand.u32 %v98, 2147483648
    %v122 = vsel %vm120, %v121, %v119
    %v123 = vmax.f32 %v110, 1e-12
    %v124 = vmax.f32 %v122, 1e-12
    %v125 = vmul.f32 %v89, %v123
    %v126 = vmul.f32 %v90, %v124
    %v127 = vrcp.pop %v125
    %v128 = vmul.f32 %v125, %v127
    %v129 = vsub.f32 1.0, %v128
    %v130 = vmul.f32 %v127, %v129
    %v131 = vadd.f32 %v127, %v130
    %vm132 = vweird.f32 %v125
    %vm133 = vweird.f32 %v127
    %vm134 = vmor %vm132, %vm133
    %v135 = vsel %vm134, %v127, %v131
    %v136 = vand.u32 2147483647, %v125
    %vm137 = vcmp.eq.f32.partialorder %v136, 8.507059e+37
    %v138 = vand.u32 %v125, 2147483648
    %v139 = vor.u32 1.1754944e-38, %v138
    %v140 = vsel %vm137, %v139, %v135
    %v141 = vmul.f32 %v53, %v140
    %v142 = vrcp.pop %v126
    %v143 = vmul.f32 %v126, %v142
    %v144 = vsub.f32 1.0, %v143
    %v145 = vmul.f32 %v142, %v144
    %v146 = vadd.f32 %v142, %v145
    %vm147 = vweird.f32 %v126
    %vm148 = vweird.f32 %v142
    %vm149 = vmor %vm147, %vm148
    %v150 = vsel %vm149, %v142, %v146
    %v151 = vand.u32 2147483647, %v126
    %vm152 = vcmp.eq.f32.partialorder %v151, 8.507059e+37
    %v153 = vand.u32 %v126, 2147483648
    %v154 = vor.u32 1.1754944e-38, %v153
    %v155 = vsel %vm152, %v154, %v150
    %v156 = vmul.f32 %v56, %v155
    %v157 = vmul.f32 %v141, 10.0
    %v158 = vmul.f32 %v156, 10.0
    %v161 = vlaneseq
    %v162 = vand.u32 %v161, 127
    %v163 = vperm.slane %v157, %v162
    %v164 = vperm.slane %v158, %v162
    %vm165 = vcmask 1041409
    %v166 = vsel %vm165, %v164, %v163
    %vm168 = vcmask 58368
    %v169 = vsel %vm168, %v166, -inf
    %170 = vmax.xlane.f32.xlu0 %v169
    %v171 = vpop.xlane.xlu0 %170
    %v173 = vperm.slane %v171, 0
    %v174 = vperm.slane %v171, 1
    %v177 = vsub.f32 %v157, %v173
    %v178 = vsub.f32 %v158, %v174
    %v179 = vmul.f32 %v177, 1.442695
    %v180 = vpow.pop %v179
    %v181 = vmul.f32 %v178, 1.442695
    %v182 = vpow.pop %v181
    %185 = vset.pattern.permute.xlu0 0
    %186 = vperm.xlu0 %185, %v180
    %v187 = vpop.permute.xlu0 %186
    %188 = vset.pattern.permute.xlu0 0
    %189 = vperm.xlu0 %188, %v182
    %v190 = vpop.permute.xlu0 %189
    %v191 = vperm.slane %v187, %v162
    %v192 = vperm.slane %v190, %v162
    %v193 = vsel %vm165, %v192, %v191
    %v195 = vsel %vm168, %v193, 0.0
    %196 = vadd.xlane.f32.xlu0 %v195
    %v197 = vpop.xlane.xlu0 %196
    %v198 = vlog2.pop %v197
    %v199 = vmul.f32 %v198, 0.6931472
    %v201 = vperm.slane %v199, 0
    %v202 = vperm.slane %v199, 1
    %v205 = vsub.f32 %v177, %v201
    %v206 = vsub.f32 %v178, %v202
    %209 = vset.pattern.permute.xlu0 0
    %210 = vperm.xlu0 %209, %v205
    %v211 = vpop.permute.xlu0 %210
    %212 = vset.pattern.permute.xlu0 0
    %213 = vperm.xlu0 %212, %v206
    %v214 = vpop.permute.xlu0 %213
    %v215 = vperm.slane %v211, %v162
    %v216 = vperm.slane %v214, %v162
    %v217 = vsel %vm165, %v216, %v215
    %v219 = vsel %vm168, %v217, 0.0
    %220 = vadd.xlane.f32.xlu0 %v219
    %v221 = vpop.xlane.xlu0 %220
    %vm222 = vcmask 1041408
    %v223 = vsel %vm222, %v221, 0.0
    %v224 = vrot.slane %v223, 4
    %v225 = vadd.f32 %v223, %v224
    %v226 = vrot.slane %v225, 2
    %v227 = vadd.f32 %v225, %v226
    %v228 = vrot.slane %v227, 1
    %v229 = vadd.f32 %v227, %v228
    %v230 = vsub.f32 0.0, %v229
    %v231 = vmul.f32 %v230, 0.0625
    %vm232 = vcmask 0
    %233 = vst.msk [vmem:[#allocation7] sm:$0x1] %vm232, %v231
    // Predicated region
    $region18: #{tpu_custom_call.1} parent=1 // pred_check
      _
    $region19: #{tpu_custom_call.1} parent=1 // pred_check_branch
      %235 = sbr.rel (0) target = $region21
    $region20: #{tpu_custom_call.1} parent=1 // pred_region
      %237 = vsyncadd [#allocation4], 0
      %s239 = sshll.u32 [#allocation7], 4
      %s240 = int_to_ptr.vmem [resolvable:$true] %s239
      %s241 = sshll.u32 %s2, 4
      %s242 = int_to_ptr.hbm [resolvable:$true] %s241
      %244 = dma.vmem_to_hbm [thread:$0]  %s240, 16, %s242, [#allocation4]
    $region21: #{tpu_custom_call.1} parent=1 // pred_fallthru
      _
    // Predicated region
    $region22: #{tpu_custom_call.1} parent=1 // pred_check
      _
    $region23: #{tpu_custom_call.1} parent=1 // pred_check_branch
      %246 = sbr.rel (0) target = $region25
    $region24: #{tpu_custom_call.1} parent=1 // pred_region
      %248 = dma.done [#allocation4], 16
    $region25: #{tpu_custom_call.1} parent=1 // pred_fallthru
      _
    %249 = vsyncpa [#allocation3], 1
    %250 = vsyncpa [#allocation6], 1
    %251 = vsyncpa [#allocation4], 1

</llo_original>
